<compile_context>
chip_gen: v7x
topology: tpu7x:2x2x1
jax: 0.10.0
libtpu: 0.0.40
codegen_flags: <defaults>
</compile_context>

<pallas_src>
import jax
import jax.numpy as jnp
from jax.experimental import pallas as pl
from jax.experimental.pallas import tpu as pltpu


def _ffn_kernel(w1_ref, w2_ref, x_ref, o_ref):
    # x_ref: [3, TB] f32 in VMEM (features x batch-lane tile)
    # w1_ref: [2, 3] f32 in SMEM (linear1.weight), w2_ref: [3, 2] f32 in SMEM
    x0 = x_ref[0:1, :]          # [1, TB]
    x1 = x_ref[1:2, :]
    x2 = x_ref[2:3, :]

    # hidden = sigmoid(W1 @ x_t)  -> two rows, pure VPU broadcast-FMAs + EUP exp
    h0 = jax.nn.sigmoid(w1_ref[0, 0] * x0 + w1_ref[0, 1] * x1 + w1_ref[0, 2] * x2)
    h1 = jax.nn.sigmoid(w1_ref[1, 0] * x0 + w1_ref[1, 1] * x1 + w1_ref[1, 2] * x2)

    # out_t = W2 @ hidden -> three full-lane row stores
    o_ref[0:1, :] = w2_ref[0, 0] * h0 + w2_ref[0, 1] * h1
    o_ref[1:2, :] = w2_ref[1, 0] * h0 + w2_ref[1, 1] * h1
    o_ref[2:3, :] = w2_ref[2, 0] * h0 + w2_ref[2, 1] * h1


def feedforward_no_bias(x, w1, w2, *, block_b=512):
    """x: [B, 3] f32, w1: [2, 3] (linear1.weight), w2: [3, 2] (linear2.weight).
    Returns sigmoid(x @ w1.T) @ w2.T, shape [B, 3]."""
    B = x.shape[0]
    x = x.astype(jnp.float32)

    # Lane-dense layout: batch on the last (lane) axis.
    xt = x.T                                            # [3, B]
    b_pad = ((B + block_b - 1) // block_b) * block_b
    b_pad = max(b_pad, block_b)
    if b_pad != B:
        xt = jnp.pad(xt, ((0, 0), (0, b_pad - B)))

    grid = (b_pad // block_b,)

    out_t = pl.pallas_call(
        _ffn_kernel,
        out_shape=jax.ShapeDtypeStruct((3, b_pad), jnp.float32),
        grid=grid,
        in_specs=[
            pl.BlockSpec(memory_space=pltpu.MemorySpace.SMEM),   # w1 (scalars)
            pl.BlockSpec(memory_space=pltpu.MemorySpace.SMEM),   # w2 (scalars)
            pl.BlockSpec((3, block_b), lambda i: (0, i)),        # x_t lane tile
        ],
        out_specs=pl.BlockSpec((3, block_b), lambda i: (0, i)),
        compiler_params=pltpu.CompilerParams(
            dimension_semantics=("parallel",),
        ),
    )(w1.astype(jnp.float32), w2.astype(jnp.float32), xt)

    return out_t[:, :B].T                               # back to [B, 3]


def _reference(x, w1, w2):
    return jax.nn.sigmoid(x @ w1.T) @ w2.T


if __name__ == "__main__":
    key = jax.random.PRNGKey(0)
    kx, k1, k2 = jax.random.split(key, 3)

    B = 8
    x = jax.random.normal(kx, (B, 3), dtype=jnp.float32)

    # Deterministic init mimicking nn.Linear's uniform(-1/sqrt(fan_in), +1/sqrt(fan_in))
    bound1 = 1.0 / (3.0 ** 0.5)
    bound2 = 1.0 / (2.0 ** 0.5)
    w1 = jax.random.uniform(k1, (2, 3), jnp.float32, -bound1, bound1)  # linear1.weight
    w2 = jax.random.uniform(k2, (3, 2), jnp.float32, -bound2, bound2)  # linear2.weight

    out = feedforward_no_bias(x, w1, w2)
    out = jax.block_until_ready(out)

    ref = _reference(x, w1, w2)
    assert out.shape == (B, 3), out.shape
    assert jnp.allclose(out, ref, atol=1e-5, rtol=1e-5), "mismatch vs reference"

    print("KERNEL_OK")
</pallas_src>

<mosaic_0001>
module attributes {stable_mosaic.version = 11 : i64} {
  func.func @_ffn_kernel(%arg0: i32, %arg1: memref<2x3xf32, #tpu.memory_space<smem>>, %arg2: memref<3x2xf32, #tpu.memory_space<smem>>, %arg3: memref<3x512xf32, #tpu.memory_space<vmem>>, %arg4: memref<3x512xf32, #tpu.memory_space<vmem>>) attributes {dimension_semantics = [#tpu.dimension_semantics<parallel>], iteration_bounds = array<i64: 1>, scalar_prefetch = 0 : i64, scratch_operands = 0 : i64, tpu.core_type = #tpu.core_type<tc>, window_params = [{transform_indices = @transform_0, window_bounds = array<i64: 2, 3>}, {transform_indices = @transform_1, window_bounds = array<i64: 3, 2>}, {transform_indices = @transform_2, window_bounds = array<i64: 3, 512>}, {transform_indices = @transform_3, window_bounds = array<i64: 3, 512>}]} {
    %c0 = arith.constant 0 : index
    %c0_0 = arith.constant 0 : index
    %0 = vector.load %arg3[%c0, %c0_0] : memref<3x512xf32, #tpu.memory_space<vmem>>, vector<1x512xf32>
    %c1 = arith.constant 1 : index
    %c0_1 = arith.constant 0 : index
    %1 = vector.load %arg3[%c1, %c0_1] : memref<3x512xf32, #tpu.memory_space<vmem>>, vector<1x512xf32>
    %c2 = arith.constant 2 : index
    %c0_2 = arith.constant 0 : index
    %2 = vector.load %arg3[%c2, %c0_2] : memref<3x512xf32, #tpu.memory_space<vmem>>, vector<1x512xf32>
    %c0_3 = arith.constant 0 : index
    %c0_4 = arith.constant 0 : index
    %3 = memref.load %arg1[%c0_3, %c0_4] : memref<2x3xf32, #tpu.memory_space<smem>>
    %4 = vector.broadcast %3 : f32 to vector<1x512xf32>
    %5 = arith.mulf %4, %0 : vector<1x512xf32>
    %c0_5 = arith.constant 0 : index
    %c1_6 = arith.constant 1 : index
    %6 = memref.load %arg1[%c0_5, %c1_6] : memref<2x3xf32, #tpu.memory_space<smem>>
    %7 = vector.broadcast %6 : f32 to vector<1x512xf32>
    %8 = arith.mulf %7, %1 : vector<1x512xf32>
    %9 = arith.addf %5, %8 : vector<1x512xf32>
    %c0_7 = arith.constant 0 : index
    %c2_8 = arith.constant 2 : index
    %10 = memref.load %arg1[%c0_7, %c2_8] : memref<2x3xf32, #tpu.memory_space<smem>>
    %11 = vector.broadcast %10 : f32 to vector<1x512xf32>
    %12 = arith.mulf %11, %2 : vector<1x512xf32>
    %13 = arith.addf %9, %12 : vector<1x512xf32>
    %14 = arith.negf %13 : vector<1x512xf32>
    %15 = math.exp %14 : vector<1x512xf32>
    %cst = arith.constant 1.000000e+00 : f32
    %16 = vector.broadcast %cst : f32 to vector<1x512xf32>
    %17 = arith.addf %16, %15 : vector<1x512xf32>
    %18 = arith.divf %16, %17 : vector<1x512xf32>
    %c1_9 = arith.constant 1 : index
    %c0_10 = arith.constant 0 : index
    %19 = memref.load %arg1[%c1_9, %c0_10] : memref<2x3xf32, #tpu.memory_space<smem>>
    %20 = vector.broadcast %19 : f32 to vector<1x512xf32>
    %21 = arith.mulf %20, %0 : vector<1x512xf32>
    %c1_11 = arith.constant 1 : index
    %c1_12 = arith.constant 1 : index
    %22 = memref.load %arg1[%c1_11, %c1_12] : memref<2x3xf32, #tpu.memory_space<smem>>
    %23 = vector.broadcast %22 : f32 to vector<1x512xf32>
    %24 = arith.mulf %23, %1 : vector<1x512xf32>
    %25 = arith.addf %21, %24 : vector<1x512xf32>
    %c1_13 = arith.constant 1 : index
    %c2_14 = arith.constant 2 : index
    %26 = memref.load %arg1[%c1_13, %c2_14] : memref<2x3xf32, #tpu.memory_space<smem>>
    %27 = vector.broadcast %26 : f32 to vector<1x512xf32>
    %28 = arith.mulf %27, %2 : vector<1x512xf32>
    %29 = arith.addf %25, %28 : vector<1x512xf32>
    %30 = arith.negf %29 : vector<1x512xf32>
    %31 = math.exp %30 : vector<1x512xf32>
    %cst_15 = arith.constant 1.000000e+00 : f32
    %32 = vector.broadcast %cst_15 : f32 to vector<1x512xf32>
    %33 = arith.addf %32, %31 : vector<1x512xf32>
    %34 = arith.divf %32, %33 : vector<1x512xf32>
    %c0_16 = arith.constant 0 : index
    %c0_17 = arith.constant 0 : index
    %35 = memref.load %arg2[%c0_16, %c0_17] : memref<3x2xf32, #tpu.memory_space<smem>>
    %36 = vector.broadcast %35 : f32 to vector<1x512xf32>
    %37 = arith.mulf %36, %18 : vector<1x512xf32>
    %c0_18 = arith.constant 0 : index
    %c1_19 = arith.constant 1 : index
    %38 = memref.load %arg2[%c0_18, %c1_19] : memref<3x2xf32, #tpu.memory_space<smem>>
    %39 = vector.broadcast %38 : f32 to vector<1x512xf32>
    %40 = arith.mulf %39, %34 : vector<1x512xf32>
    %41 = arith.addf %37, %40 : vector<1x512xf32>
    %c0_20 = arith.constant 0 : index
    %c0_21 = arith.constant 0 : index
    %42 = vector.load %arg4[%c0_20, %c0_21] : memref<3x512xf32, #tpu.memory_space<vmem>>, vector<1x512xf32>
    tpu.vector_store %arg4[%c0_20, %c0_21], %41 {strides = array<i32>} : memref<3x512xf32, #tpu.memory_space<vmem>>, vector<1x512xf32>,
    %c1_22 = arith.constant 1 : index
    %c0_23 = arith.constant 0 : index
    %43 = memref.load %arg2[%c1_22, %c0_23] : memref<3x2xf32, #tpu.memory_space<smem>>
    %44 = vector.broadcast %43 : f32 to vector<1x512xf32>
    %45 = arith.mulf %44, %18 : vector<1x512xf32>
    %c1_24 = arith.constant 1 : index
    %c1_25 = arith.constant 1 : index
    %46 = memref.load %arg2[%c1_24, %c1_25] : memref<3x2xf32, #tpu.memory_space<smem>>
    %47 = vector.broadcast %46 : f32 to vector<1x512xf32>
    %48 = arith.mulf %47, %34 : vector<1x512xf32>
    %49 = arith.addf %45, %48 : vector<1x512xf32>
    %c1_26 = arith.constant 1 : index
    %c0_27 = arith.constant 0 : index
    %50 = vector.load %arg4[%c1_26, %c0_27] : memref<3x512xf32, #tpu.memory_space<vmem>>, vector<1x512xf32>
    tpu.vector_store %arg4[%c1_26, %c0_27], %49 {strides = array<i32>} : memref<3x512xf32, #tpu.memory_space<vmem>>, vector<1x512xf32>,
    %c2_28 = arith.constant 2 : index
    %c0_29 = arith.constant 0 : index
    %51 = memref.load %arg2[%c2_28, %c0_29] : memref<3x2xf32, #tpu.memory_space<smem>>
    %52 = vector.broadcast %51 : f32 to vector<1x512xf32>
    %53 = arith.mulf %52, %18 : vector<1x512xf32>
    %c2_30 = arith.constant 2 : index
    %c1_31 = arith.constant 1 : index
    %54 = memref.load %arg2[%c2_30, %c1_31] : memref<3x2xf32, #tpu.memory_space<smem>>
    %55 = vector.broadcast %54 : f32 to vector<1x512xf32>
    %56 = arith.mulf %55, %34 : vector<1x512xf32>
    %57 = arith.addf %53, %56 : vector<1x512xf32>
    %c2_32 = arith.constant 2 : index
    %c0_33 = arith.constant 0 : index
    %58 = vector.load %arg4[%c2_32, %c0_33] : memref<3x512xf32, #tpu.memory_space<vmem>>, vector<1x512xf32>
    tpu.vector_store %arg4[%c2_32, %c0_33], %57 {strides = array<i32>} : memref<3x512xf32, #tpu.memory_space<vmem>>, vector<1x512xf32>,
    return
  }
  func.func @transform_0(%arg0: i32) -> (i32, i32) {
    %c0_i32 = arith.constant 0 : i32
    %c0_i32_0 = arith.constant 0 : i32
    %c0_i32_1 = arith.constant 0 : i32
    return %c0_i32, %c0_i32_0 : i32, i32
  }
  func.func @transform_1(%arg0: i32) -> (i32, i32) {
    %c0_i32 = arith.constant 0 : i32
    %c0_i32_0 = arith.constant 0 : i32
    %c0_i32_1 = arith.constant 0 : i32
    return %c0_i32, %c0_i32_0 : i32, i32
  }
  func.func @transform_2(%arg0: i32) -> (i32, i32) {
    %c0_i32 = arith.constant 0 : i32
    %c0_i32_0 = arith.constant 0 : i32
    return %c0_i32, %arg0 : i32, i32
  }
  func.func @transform_3(%arg0: i32) -> (i32, i32) {
    %c0_i32 = arith.constant 0 : i32
    %c0_i32_0 = arith.constant 0 : i32
    return %c0_i32, %arg0 : i32, i32
  }
}

</mosaic_0001>

<llo_original>
// kernel: tpu_custom_call.1
$region0: #{tpu_custom_call.1}
  #allocation0 [shape = 'u32[]', space=smem, size = 0x4, offset = 0x4, fixed_abs, tag = 'smem constant byte address 0x4 - core index']
  #allocation1 [shape = 'u32[144,128]{1,0:T(1,128)}', space=vmem, size = 0x12000, scoped, tag = 'internal scratch']
  %s0 = inlined_call_operand.vmem [shape: f32[2,3], index: 0, kind: input, shape index: {}]
  %s1 = inlined_call_operand.vmem [shape: f32[3,2], index: 1, kind: input, shape index: {}]
  %s2 = inlined_call_operand.hbm [shape: f32[3,512], index: 2, kind: input, shape index: {}]
  %s3 = inlined_call_operand.hbm [shape: f32[3,512], index: 3, kind: output, shape index: {}]
  %s4 = sld [smem:[#allocation0]]
  $region34: #{tpu_custom_call.1} parent=0
    _
  %s6 = ssub.s32 1, %s4
  %s7 = scalar_select 0, %s6, %s4
  $region1: #{tpu_custom_call.1} parent=0
    #allocation2 [shape = 'u8[1024]{0}', space=smem, size = 0x400, scoped, tag = 'input window, operand 0, single buffered']
    #allocation3 [shape = 's32[1]{0}', space=sflag, size = 0x4, scoped, tag = 'scoped memory for tpu_custom_call.1']
    #allocation4 [shape = 's32[1]{0}', space=sflag, size = 0x4, scoped, tag = 'scoped memory for tpu_custom_call.1']
    #allocation5 [shape = 's32[1]{0}', space=sflag, size = 0x4, scoped, tag = 'scoped memory for tpu_custom_call.1']
    #allocation6 [shape = 'u8[2048]{0}', space=smem, size = 0x800, scoped, tag = 'input window, operand 1, single buffered']
    #allocation7 [shape = 's32[1]{0}', space=sflag, size = 0x4, scoped, tag = 'scoped memory for tpu_custom_call.1']
    #allocation8 [shape = 'u8[8192]{0}', space=vmem, size = 0x2000, scoped, tag = 'input window, operand 2, single buffered']
    #allocation9 [shape = 'u8[8192]{0}', space=vmem, size = 0x2000, scoped, tag = 'output window, operand 0, single buffered']
    %8 = vsyncpa [#allocation5], 0
    %9 = vsyncpa [#allocation7], 0
    %10 = vsyncpa [#allocation3], 0
    %11 = vsyncpa [#allocation4], 0
    // Predicated region
    $region2: #{tpu_custom_call.1} parent=1 // pred_check
      _
    $region3: #{tpu_custom_call.1} parent=1 // pred_check_branch
      %13 = sbr.rel (0) target = $region5
    $region4: #{tpu_custom_call.1} parent=1 // pred_region
      %s15 = ssub.s32 32, 32
      %16 = vsyncadd [#allocation5], %s15
      %s18 = sshll.u32 %s0, 4
      %s19 = int_to_ptr.vmem [resolvable:$true] %s18
      %21 = dma.vmem_to_smem %s19, 32, [#allocation2], [#allocation5]
    $region5: #{tpu_custom_call.1} parent=1 // pred_fallthru
      _
    // Predicated region
    $region6: #{tpu_custom_call.1} parent=1 // pred_check
      _
    $region7: #{tpu_custom_call.1} parent=1 // pred_check_branch
      %23 = sbr.rel (0) target = $region9
    $region8: #{tpu_custom_call.1} parent=1 // pred_region
      %s25 = ssub.s32 64, 64
      %26 = vsyncadd [#allocation7], %s25
      %s28 = sshll.u32 %s1, 4
      %s29 = int_to_ptr.vmem [resolvable:$true] %s28
      %31 = dma.vmem_to_smem %s29, 64, [#allocation6], [#allocation7]
    $region9: #{tpu_custom_call.1} parent=1 // pred_fallthru
      _
    // Predicated region
    $region10: #{tpu_custom_call.1} parent=1 // pred_check
      _
    $region11: #{tpu_custom_call.1} parent=1 // pred_check_branch
      %33 = sbr.rel (0) target = $region13
    $region12: #{tpu_custom_call.1} parent=1 // pred_region
      %s35 = ssub.s32 256, 256
      %36 = vsyncadd [#allocation3], %s35
      %s38 = sshll.u32 [#allocation8], 4
      %s39 = int_to_ptr.vmem [resolvable:$true] %s38
      %41 = dma.hbm_to_vmem [thread:$0]  %s2, 256, %s39, [#allocation3]
    $region13: #{tpu_custom_call.1} parent=1 // pred_fallthru
      _
    // Predicated region
    $region14: #{tpu_custom_call.1} parent=1 // pred_check
      _
    $region15: #{tpu_custom_call.1} parent=1 // pred_check_branch
      %43 = sbr.rel (0) target = $region17
    $region16: #{tpu_custom_call.1} parent=1 // pred_region
      %44 = dma.done [#allocation5], 32
    $region17: #{tpu_custom_call.1} parent=1 // pred_fallthru
      _
    // Predicated region
    $region18: #{tpu_custom_call.1} parent=1 // pred_check
      _
    $region19: #{tpu_custom_call.1} parent=1 // pred_check_branch
      %46 = sbr.rel (0) target = $region21
    $region20: #{tpu_custom_call.1} parent=1 // pred_region
      %47 = dma.done [#allocation7], 64
    $region21: #{tpu_custom_call.1} parent=1 // pred_fallthru
      _
    // Predicated region
    $region22: #{tpu_custom_call.1} parent=1 // pred_check
      _
    $region23: #{tpu_custom_call.1} parent=1 // pred_check_branch
      %49 = sbr.rel (0) target = $region25
    $region24: #{tpu_custom_call.1} parent=1 // pred_region
      %50 = dma.done [#allocation3], 256
    $region25: #{tpu_custom_call.1} parent=1 // pred_fallthru
      _
    %51 = sfence
    %v52 = vld [vmem:[#allocation8] ss:$4 sm:$0xf]
    %s53 = scalar_lea.vmem [#allocation8], 1
    %v54 = vld [vmem:[%s53] ss:$4 sm:$0xf]
    %s55 = scalar_lea.vmem [#allocation8], 2
    %v56 = vld [vmem:[%s55] ss:$4 sm:$0xf]
    %s57 = sld [smem:[#allocation2]]
    %v58 = vstv %s57
    %v59 = vmul.f32 %v58, %v52
    %s60 = sld [smem:[#allocation2 + $0x1]]
    %v61 = vstv %s60
    %v62 = vmul.f32 %v61, %v54
    %v63 = vadd.f32 %v59, %v62
    %s64 = sld [smem:[#allocation2 + $0x2]]
    %v65 = vstv %s64
    %v66 = vmul.f32 %v65, %v56
    %v67 = vadd.f32 %v63, %v66
    %v68 = vxor.u32 %v67, 2147483648
    %v69 = vmul.f32 %v68, 1.442695
    %v70 = vpow.pop %v69
    %v71 = vadd.f32 %v70, 1.0
    %v72 = vrcp.pop %v71
    %v73 = vmul.f32 1.0, %v72
    %s74 = sld [smem:[#allocation2 + $0x80]]
    %v75 = vstv %s74
    %v76 = vmul.f32 %v75, %v52
    %s77 = sld [smem:[#allocation2 + $0x81]]
    %v78 = vstv %s77
    %v79 = vmul.f32 %v78, %v54
    %v80 = vadd.f32 %v76, %v79
    %s81 = sld [smem:[#allocation2 + $0x82]]
    %v82 = vstv %s81
    %v83 = vmul.f32 %v82, %v56
    %v84 = vadd.f32 %v80, %v83
    %v85 = vxor.u32 %v84, 2147483648
    %v86 = vmul.f32 %v85, 1.442695
    %v87 = vpow.pop %v86
    %v88 = vadd.f32 %v87, 1.0
    %v89 = vrcp.pop %v88
    %v90 = vmul.f32 1.0, %v89
    %s91 = sld [smem:[#allocation6]]
    %v92 = vstv %s91
    %v93 = vmul.f32 %v92, %v73
    %s94 = sld [smem:[#allocation6 + $0x1]]
    %v95 = vstv %s94
    %v96 = vmul.f32 %v95, %v90
    %v97 = vadd.f32 %v93, %v96
    %v98 = vlaneseq
    %vm99 = vcmp.ge.s32.totalorder %v98, 0
    %vm100 = vcmp.lt.s32.totalorder %v98, 512
    %vm101 = vmand %vm99, %vm100
    %102 = vst.msk [vmem:[#allocation9] ss:$4 sm:$0xf] %vm101, %v97
    %s103 = sld [smem:[#allocation6 + $0x80]]
    %v104 = vstv %s103
    %v105 = vmul.f32 %v104, %v73
    %s106 = sld [smem:[#allocation6 + $0x81]]
    %v107 = vstv %s106
    %v108 = vmul.f32 %v107, %v90
    %v109 = vadd.f32 %v105, %v108
    %s110 = scalar_lea.vmem [#allocation9], 1
    %111 = vst.msk [vmem:[%s110] ss:$4 sm:$0xf] %vm101, %v109
    %s112 = sld [smem:[#allocation6 + $0x100]]
    %v113 = vstv %s112
    %v114 = vmul.f32 %v113, %v73
    %s115 = sld [smem:[#allocation6 + $0x101]]
    %v116 = vstv %s115
    %v117 = vmul.f32 %v116, %v90
    %v118 = vadd.f32 %v114, %v117
    %s119 = scalar_lea.vmem [#allocation9], 2
    %120 = vst.msk [vmem:[%s119] ss:$4 sm:$0xf] %vm101, %v118
    // Predicated region
    $region26: #{tpu_custom_call.1} parent=1 // pred_check
      _
    $region27: #{tpu_custom_call.1} parent=1 // pred_check_branch
      %122 = sbr.rel (0) target = $region29
    $region28: #{tpu_custom_call.1} parent=1 // pred_region
      %s124 = ssub.s32 256, 256
      %125 = vsyncadd [#allocation4], %s124
      %s127 = sshll.u32 [#allocation9], 4
      %s128 = int_to_ptr.vmem [resolvable:$true] %s127
      %130 = dma.vmem_to_hbm [thread:$0]  %s128, 256, %s3, [#allocation4]
    $region29: #{tpu_custom_call.1} parent=1 // pred_fallthru
      _
    // Predicated region
    $region30: #{tpu_custom_call.1} parent=1 // pred_check
      _
    $region31: #{tpu_custom_call.1} parent=1 // pred_check_branch
      %132 = sbr.rel (0) target = $region33
    $region32: #{tpu_custom_call.1} parent=1 // pred_region
      %133 = dma.done [#allocation4], 256
    $region33: #{tpu_custom_call.1} parent=1 // pred_fallthru
      _
    %134 = vsyncpa [#allocation3], 1
    %135 = vsyncpa [#allocation4], 1
    %136 = vsyncpa [#allocation5], 1
    %137 = vsyncpa [#allocation7], 1

</llo_original>
